<compile_context>
chip_gen: v7x
topology: tpu7x:2x2x1
jax: 0.10.0
libtpu: 0.0.40
codegen_flags: <defaults>
</compile_context>

<pallas_src>
import functools

import jax
import jax.numpy as jnp
from jax.experimental import pallas as pl
from jax.experimental.pallas import tpu as pltpu


def _make_contrastive_kernel(G, pos_w, neg_w):
    """Builds the per-column-tile kernel with the loss constants baked in."""

    def kernel(b_all_ref, b_tile_ref, l_ref, out_ref):
        # (PG, N) bf16 @ (N, TN) bf16 -> (PG, TN) f32 on the MXU.
        tmp = jnp.dot(b_all_ref[...], l_ref[...],
                      preferred_element_type=jnp.float32)
        # Elementwise beta * (beta @ L) restricted to this column tile (f32 VPU).
        prod = b_tile_ref[...] * tmp
        # Sublane-aligned segment sums: rows [:G] are the positive beta, rows
        # [G:] are the num_perm permuted (negative) betas plus zero padding.
        partial = (jnp.float32(pos_w) * jnp.sum(prod[:G, :])
                   + jnp.float32(neg_w) * jnp.sum(prod[G:, :]))
        # Lane-dense per-tile partial block; summed + clamped in the wrapper.
        out_ref[...] = jnp.broadcast_to(partial.reshape(1, 1), (8, 128))

    return kernel


def _contrastive_loss_pallas(betas_flat, inv_cov, *, G, N, num_perm,
                             neg2pos_ratio, lower_bound):
    """betas_flat: (P*G, N) f32 (positive rows first); inv_cov: (N, N) -> scalar."""
    PG = betas_flat.shape[0]
    PG_pad = pl.cdiv(PG, 16) * 16       # bf16 sublane packing
    N_pad = pl.cdiv(N, 128) * 128       # lane tile alignment

    betas_f32 = betas_flat.astype(jnp.float32)
    inv_cov_f32 = inv_cov.astype(jnp.float32)
    if PG_pad != PG or N_pad != N:
        betas_f32 = jnp.zeros((PG_pad, N_pad), jnp.float32).at[:PG, :N].set(betas_f32)
    if N_pad != N:
        inv_cov_f32 = jnp.zeros((N_pad, N_pad), jnp.float32).at[:N, :N].set(inv_cov_f32)

    # bf16 operands for the MXU / the dominant HBM stream; f32 everywhere else.
    betas_bf = betas_f32.astype(jnp.bfloat16)
    l_bf = inv_cov_f32.astype(jnp.bfloat16)

    # MXU-matched column tile width (256 on v6e/v7x-sized problems, else 128).
    TN = 256 if (N_pad % 256 == 0) else 128
    num_tiles = N_pad // TN

    pos_w = 1.0 / (G * N)                          # positive rows
    neg_w = -neg2pos_ratio / (num_perm * G * N)    # permuted (negative) rows
    kernel = _make_contrastive_kernel(G, pos_w, neg_w)

    # VMEM budget: resident bf16 betas + double-buffered f32 beta tile, bf16 L
    # tile and the (8,128) partial block, plus slack. Capped at 64 MiB so the
    # same configuration also fits v7x's smaller physical VMEM.
    needed = (2 * PG_pad * N_pad * 2 + 2 * PG_pad * TN * 4
              + 2 * N_pad * TN * 2 + 2 * 8 * 128 * 4 + (2 << 20))
    vmem_limit = int(min(max(needed, 32 << 20), 64 << 20))

    cost = pl.CostEstimate(
        flops=2 * PG_pad * N_pad * N_pad + 3 * PG_pad * N_pad,
        transcendentals=0,
        bytes_accessed=(PG_pad * N_pad * 2 + PG_pad * N_pad * 4
                        + N_pad * N_pad * 2 + num_tiles * 8 * 128 * 4),
    )

    partial_blocks = pl.pallas_call(
        kernel,
        out_shape=jax.ShapeDtypeStruct((num_tiles * 8, 128), jnp.float32),
        grid=(num_tiles,),
        in_specs=[
            # Full stacked betas, bf16, resident across the whole grid (MXU LHS).
            pl.BlockSpec((PG_pad, N_pad), lambda j: (0, 0)),
            # f32 column tile of betas for the elementwise product.
            pl.BlockSpec((PG_pad, TN), lambda j: (0, j)),
            # bf16 column tile of inv_cov: the dominant, pipelined stream.
            pl.BlockSpec((N_pad, TN), lambda j: (0, j)),
        ],
        out_specs=pl.BlockSpec((8, 128), lambda j: (j, 0)),
        compiler_params=pltpu.CompilerParams(
            dimension_semantics=("parallel",),
            vmem_limit_bytes=vmem_limit,
        ),
        cost_estimate=cost,
    )(betas_bf, betas_f32, l_bf)

    partials = partial_blocks.reshape(num_tiles, 8, 128)[:, 0, 0]
    total = jnp.sum(partials)
    return jnp.maximum(total, jnp.float32(lower_bound))


@functools.partial(jax.jit, static_argnames=("neg2pos_ratio", "lower_bound"))
def contrastive_spatial_loss(coefs, inv_cov, perms, *,
                             neg2pos_ratio=0.5, lower_bound=-1.0):
    """coefs: (G, N); inv_cov: (N, N); perms: (num_perm, N) int32 permutations."""
    G, N = coefs.shape
    num_perm = perms.shape[0]
    # Negative (permuted) betas: coefs[:, perm] for each perm -> (num_perm, G, N).
    # Built inside jit so the gather/stack fuse into the same XLA computation.
    neg_betas = jnp.transpose(jnp.take(coefs, perms, axis=1), (1, 0, 2))
    betas = jnp.concatenate([coefs[None], neg_betas], axis=0)     # (P, G, N)
    betas_flat = betas.reshape((num_perm + 1) * G, N)             # (P*G, N)
    return _contrastive_loss_pallas(
        betas_flat, inv_cov, G=G, N=N, num_perm=num_perm,
        neg2pos_ratio=neg2pos_ratio, lower_bound=lower_bound)
    # TODO(synk): the 'kl' prior branch, per-group inv_cov / non-unit confidences
    # paths of SpatialLoss are not translated (default ContrastiveSpatialLoss only).


def contrastive_spatial_loss_ref(coefs, inv_cov, perms,
                                 neg2pos_ratio=0.5, lower_bound=-1.0):
    """Pure-JAX f32 reference for validation."""
    G, N = coefs.shape

    def quad(b):
        return jnp.sum(b * (b @ inv_cov)) / (G * N)

    pos = quad(coefs)
    negs = jnp.stack([quad(coefs[:, p]) for p in perms])
    neg = jnp.mean(negs)
    return jnp.maximum(pos - neg2pos_ratio * neg, jnp.float32(lower_bound))


def make_icar_inv_cov(n):
    """Deterministic synthetic 'icar' inverse covariance (normalized laplacian).

    Ring-lattice adjacency (2 nearest neighbors on each side), L = D - W,
    standardized so diag(L) == 1 (standardize_cov=True).
    """
    idx = jnp.arange(n)
    w = jnp.zeros((n, n), jnp.float32)
    for k in (1, 2):
        w = w.at[idx, (idx + k) % n].set(1.0)
        w = w.at[idx, (idx - k) % n].set(1.0)
    deg = jnp.sum(w, axis=1)
    lap = jnp.diag(deg) - w
    dinv = 1.0 / jnp.sqrt(deg)
    return lap * dinv[:, None] * dinv[None, :]


if __name__ == "__main__":
    G, N, NUM_PERM = 8, 128, 10     # num_group x num_spot, num_perm negative graphs

    key = jax.random.PRNGKey(0)
    k_coef, k_perm = jax.random.split(key)

    coefs = jax.random.normal(k_coef, (G, N), dtype=jnp.float32)
    inv_cov = make_icar_inv_cov(N)

    # torch.randperm equivalents: deterministic permutations of the spot axis.
    perm_keys = jax.random.split(k_perm, NUM_PERM)
    perms = jnp.stack(
        [jax.random.permutation(k, N) for k in perm_keys]).astype(jnp.int32)

    loss = contrastive_spatial_loss(coefs, inv_cov, perms,
                                    neg2pos_ratio=0.5, lower_bound=-1.0)
    loss = jax.block_until_ready(loss)

    ref = jax.block_until_ready(
        contrastive_spatial_loss_ref(coefs, inv_cov, perms,
                                     neg2pos_ratio=0.5, lower_bound=-1.0))
    assert abs(float(loss) - float(ref)) < 5e-3, (float(loss), float(ref))
    print("KERNEL_OK")
</pallas_src>

<mosaic_0001>
module attributes {stable_mosaic.version = 11 : i64} {
  func.func @kernel(%arg0: i32, %arg1: memref<96x128xbf16, #tpu.memory_space<vmem>>, %arg2: memref<96x128xf32, #tpu.memory_space<vmem>>, %arg3: memref<128x128xbf16, #tpu.memory_space<vmem>>, %arg4: memref<8x128xf32, #tpu.memory_space<vmem>>) attributes {dimension_semantics = [#tpu.dimension_semantics<parallel>], iteration_bounds = array<i64: 1>, scalar_prefetch = 0 : i64, scratch_operands = 0 : i64, tpu.core_type = #tpu.core_type<tc>, window_params = [{pipeline_mode = #tpu.pipeline_mode<synchronous>, transform_indices = @transform_0, window_bounds = array<i64: 96, 128>}, {transform_indices = @transform_1, window_bounds = array<i64: 96, 128>}, {transform_indices = @transform_2, window_bounds = array<i64: 128, 128>}, {transform_indices = @transform_3, window_bounds = array<i64: 8, 128>}]} {
    %c0 = arith.constant 0 : index
    %c0_0 = arith.constant 0 : index
    %0 = vector.load %arg1[%c0, %c0_0] : memref<96x128xbf16, #tpu.memory_space<vmem>>, vector<96x128xbf16>
    %c0_1 = arith.constant 0 : index
    %c0_2 = arith.constant 0 : index
    %1 = vector.load %arg3[%c0_1, %c0_2] : memref<128x128xbf16, #tpu.memory_space<vmem>>, vector<128x128xbf16>
    %cst = arith.constant dense<0.000000e+00> : vector<96x128xf32>
    %2 = tpu.matmul %0, %1, %cst {dimension_numbers = #tpu.dot_dimension_numbers<[1], [0], [0], [1], [0, 0, 1, 1], [], []>} : vector<96x128xbf16>, vector<128x128xbf16>, vector<96x128xf32> -> vector<96x128xf32>
    %c0_3 = arith.constant 0 : index
    %c0_4 = arith.constant 0 : index
    %3 = vector.load %arg2[%c0_3, %c0_4] : memref<96x128xf32, #tpu.memory_space<vmem>>, vector<96x128xf32>
    %4 = arith.mulf %3, %2 : vector<96x128xf32>
    %5 = vector.extract_strided_slice %4 {offsets = [0, 0], sizes = [8, 128], strides = [1, 1]} : vector<96x128xf32> to vector<8x128xf32>
    %6 = vector.shape_cast %5 : vector<8x128xf32> to vector<1x8x128xf32>
    %cst_5 = arith.constant dense<0.000000e+00> : vector<1xf32>
    %7 = vector.multi_reduction <add>, %6, %cst_5 [1, 2] : vector<1x8x128xf32> to vector<1xf32>
    %8 = vector.shape_cast %7 : vector<1xf32> to vector<1x1x1xf32>
    %9 = vector.extract %8[0, 0, 0] : f32 from vector<1x1x1xf32>
    %cst_6 = arith.constant 9.765625E-4 : f32
    %10 = arith.mulf %cst_6, %9 : f32
    %11 = vector.extract_strided_slice %4 {offsets = [8, 0], sizes = [88, 128], strides = [1, 1]} : vector<96x128xf32> to vector<88x128xf32>
    %12 = vector.shape_cast %11 : vector<88x128xf32> to vector<1x88x128xf32>
    %cst_7 = arith.constant dense<0.000000e+00> : vector<1xf32>
    %13 = vector.multi_reduction <add>, %12, %cst_7 [1, 2] : vector<1x88x128xf32> to vector<1xf32>
    %14 = vector.shape_cast %13 : vector<1xf32> to vector<1x1x1xf32>
    %15 = vector.extract %14[0, 0, 0] : f32 from vector<1x1x1xf32>
    %cst_8 = arith.constant -4.88281257E-5 : f32
    %16 = arith.mulf %cst_8, %15 : f32
    %17 = arith.addf %10, %16 : f32
    %18 = vector.broadcast %17 : f32 to vector<1x1xf32>
    %19 = vector.shape_cast %18 : vector<1x1xf32> to vector<1x1xf32>
    %20 = vector.broadcast %19 : vector<1x1xf32> to vector<8x128xf32>
    %c0_9 = arith.constant 0 : index
    %c0_10 = arith.constant 0 : index
    %21 = vector.load %arg4[%c0_9, %c0_10] : memref<8x128xf32, #tpu.memory_space<vmem>>, vector<8x128xf32>
    tpu.vector_store %arg4[%c0_9, %c0_10], %20 {strides = array<i32>} : memref<8x128xf32, #tpu.memory_space<vmem>>, vector<8x128xf32>,
    return
  }
  func.func @transform_0(%arg0: i32) -> (i32, i32) {
    %c0_i32 = arith.constant 0 : i32
    %c0_i32_0 = arith.constant 0 : i32
    %c0_i32_1 = arith.constant 0 : i32
    return %c0_i32, %c0_i32_0 : i32, i32
  }
  func.func @transform_1(%arg0: i32) -> (i32, i32) {
    %c0_i32 = arith.constant 0 : i32
    %c0_i32_0 = arith.constant 0 : i32
    return %c0_i32, %arg0 : i32, i32
  }
  func.func @transform_2(%arg0: i32) -> (i32, i32) {
    %c0_i32 = arith.constant 0 : i32
    %c0_i32_0 = arith.constant 0 : i32
    return %c0_i32, %arg0 : i32, i32
  }
  func.func @transform_3(%arg0: i32) -> (i32, i32) {
    %c0_i32 = arith.constant 0 : i32
    %c0_i32_0 = arith.constant 0 : i32
    return %arg0, %c0_i32 : i32, i32
  }
}

</mosaic_0001>

<llo_original>
// kernel: contrastive_spatial_loss.1
$region0: #{contrastive_spatial_loss.1}
  #allocation0 [shape = 'u32[]', space=smem, size = 0x4, offset = 0x4, fixed_abs, tag = 'smem constant byte address 0x4 - core index']
  #allocation1 [shape = 'u32[144,128]{1,0:T(1,128)}', space=vmem, size = 0x12000, scoped, tag = 'internal scratch']
  %s0 = inlined_call_operand.vmem [shape: bf16[96,128], index: 0, kind: input, shape index: {}]
  %s1 = inlined_call_operand.vmem [shape: f32[96,128], index: 1, kind: input, shape index: {}]
  %s2 = inlined_call_operand.vmem [shape: bf16[128,128], index: 2, kind: input, shape index: {}]
  %s3 = inlined_call_operand.vmem [shape: f32[8,128], index: 3, kind: output, shape index: {}]
  %s4 = sld [smem:[#allocation0]]
  $region22: #{contrastive_spatial_loss.1} parent=0
    _
  %s6 = ssub.s32 1, %s4
  %s7 = scalar_select 0, %s6, %s4
  // Predicated region
  $region2: #{contrastive_spatial_loss.1} parent=0 // pred_check
    _
  $region3: #{contrastive_spatial_loss.1} parent=0 // pred_check_branch
    %9 = sbr.rel (0) target = $region5
  $region4: #{contrastive_spatial_loss.1} parent=0 // pred_region
    _
  $region5: #{contrastive_spatial_loss.1} parent=0 // pred_fallthru
    _
  // Predicated region
  $region6: #{contrastive_spatial_loss.1} parent=0 // pred_check
    _
  $region7: #{contrastive_spatial_loss.1} parent=0 // pred_check_branch
    %11 = sbr.rel (0) target = $region9
  $region8: #{contrastive_spatial_loss.1} parent=0 // pred_region
    _
  $region9: #{contrastive_spatial_loss.1} parent=0 // pred_fallthru
    _
  // Predicated region
  $region10: #{contrastive_spatial_loss.1} parent=0 // pred_check
    _
  $region11: #{contrastive_spatial_loss.1} parent=0 // pred_check_branch
    %13 = sbr.rel (0) target = $region13
  $region12: #{contrastive_spatial_loss.1} parent=0 // pred_region
    _
  $region13: #{contrastive_spatial_loss.1} parent=0 // pred_fallthru
    _
  %v15 = vld [vmem:[%s0] sm:$0xf]
  %v16 = vld [vmem:[%s0 + $0x4] sm:$0xf]
  %v17 = vld [vmem:[%s0 + $0x8] sm:$0xf]
  %v18 = vld [vmem:[%s0 + $0xc] sm:$0xf]
  %v19 = vld [vmem:[%s0 + $0x10] sm:$0xf]
  %v20 = vld [vmem:[%s0 + $0x14] sm:$0xf]
  %v21 = vld [vmem:[%s0 + $0x18] sm:$0xf]
  %v22 = vld [vmem:[%s0 + $0x1c] sm:$0xf]
  %v23 = vld [vmem:[%s0 + $0x20] sm:$0xf]
  %v24 = vld [vmem:[%s0 + $0x24] sm:$0xf]
  %v25 = vld [vmem:[%s0 + $0x28] sm:$0xf]
  %v26 = vld [vmem:[%s0 + $0x2c] sm:$0xf]
  %v27 = vld [vmem:[%s2] sm:$0xf]
  %v28 = vld [vmem:[%s2 + $0x4] sm:$0xf]
  %v29 = vld [vmem:[%s2 + $0x8] sm:$0xf]
  %v30 = vld [vmem:[%s2 + $0xc] sm:$0xf]
  %v31 = vld [vmem:[%s2 + $0x10] sm:$0xf]
  %v32 = vld [vmem:[%s2 + $0x14] sm:$0xf]
  %v33 = vld [vmem:[%s2 + $0x18] sm:$0xf]
  %v34 = vld [vmem:[%s2 + $0x1c] sm:$0xf]
  %v35 = vld [vmem:[%s2 + $0x20] sm:$0xf]
  %v36 = vld [vmem:[%s2 + $0x24] sm:$0xf]
  %v37 = vld [vmem:[%s2 + $0x28] sm:$0xf]
  %v38 = vld [vmem:[%s2 + $0x2c] sm:$0xf]
  %v39 = vld [vmem:[%s2 + $0x30] sm:$0xf]
  %v40 = vld [vmem:[%s2 + $0x34] sm:$0xf]
  %v41 = vld [vmem:[%s2 + $0x38] sm:$0xf]
  %v42 = vld [vmem:[%s2 + $0x3c] sm:$0xf]
  %v55 = vunpack.c.l.b16 %v15
  %v56 = vunpack.c.l.b16 %v16
  %v57 = vunpack.c.l.b16 %v17
  %v58 = vunpack.c.l.b16 %v18
  %v59 = vunpack.c.l.b16 %v19
  %v60 = vunpack.c.l.b16 %v20
  %v61 = vunpack.c.l.b16 %v21
  %v62 = vunpack.c.l.b16 %v22
  %v63 = vunpack.c.l.b16 %v23
  %v64 = vunpack.c.l.b16 %v24
  %v65 = vunpack.c.l.b16 %v25
  %v66 = vunpack.c.l.b16 %v26
  %v67 = vpack.c.b16 %v56, %v55
  %v68 = vpack.c.b16 %v58, %v57
  %v69 = vpack.c.b16 %v60, %v59
  %v70 = vpack.c.b16 %v62, %v61
  %v71 = vpack.c.b16 %v64, %v63
  %v72 = vpack.c.b16 %v66, %v65
  %v95 = vunpack.c.l.b16 %v27
  %v96 = vunpack.c.l.b16 %v28
  %v97 = vunpack.c.l.b16 %v29
  %v98 = vunpack.c.l.b16 %v30
  %v99 = vunpack.c.l.b16 %v31
  %v100 = vunpack.c.l.b16 %v32
  %v101 = vunpack.c.l.b16 %v33
  %v102 = vunpack.c.l.b16 %v34
  %v103 = vunpack.c.l.b16 %v35
  %v104 = vunpack.c.l.b16 %v36
  %v105 = vunpack.c.l.b16 %v37
  %v106 = vunpack.c.l.b16 %v38
  %v107 = vunpack.c.l.b16 %v39
  %v108 = vunpack.c.l.b16 %v40
  %v109 = vunpack.c.l.b16 %v41
  %v110 = vunpack.c.l.b16 %v42
  %v111 = vpack.c.b16 %v96, %v95
  %v112 = vpack.c.b16 %v98, %v97
  %v113 = vpack.c.b16 %v100, %v99
  %v114 = vpack.c.b16 %v102, %v101
  %v115 = vpack.c.b16 %v104, %v103
  %v116 = vpack.c.b16 %v106, %v105
  %v117 = vpack.c.b16 %v108, %v107
  %v118 = vpack.c.b16 %v110, %v109
  %127 = vmatprep.subr.bf16.mxu0 0
  %128 = vmatpush1.bf16.msra.mxu0 %v111
  %129 = vmatprep.subr.bf16.mxu0 0
  %130 = vmatpush1.bf16.msra.mxu0 %v112
  %131 = vmatprep.subr.bf16.mxu0 0
  %132 = vmatpush1.bf16.msra.mxu0 %v113
  %133 = vmatprep.subr.bf16.mxu0 0
  %134 = vmatpush1.bf16.msra.mxu0 %v114
  %135 = vmatprep.subr.bf16.mxu0 0
  %136 = vmatpush1.bf16.msra.mxu0 %v115
  %137 = vmatprep.subr.bf16.mxu0 0
  %138 = vmatpush1.bf16.msra.mxu0 %v116
  %139 = vmatprep.subr.bf16.mxu0 0
  %140 = vmatpush1.bf16.msra.mxu0 %v117
  %141 = vmatprep.subr.bf16.mxu0 0
  %142 = vmatpush1.bf16.msra.mxu0 %v118
  %143 = vmatprep.subr.bf16.mxu0 0
  %144 = vmatpush1.bf16.msra.mxu0 0
  %145 = vmatprep.subr.bf16.mxu0 0
  %146 = vmatpush1.bf16.msra.mxu0 0
  %147 = vmatprep.subr.bf16.mxu0 0
  %148 = vmatpush1.bf16.msra.mxu0 0
  %149 = vmatprep.subr.bf16.mxu0 0
  %150 = vmatpush1.bf16.msra.mxu0 0
  %151 = vmatprep.subr.bf16.mxu0 0
  %152 = vmatpush1.bf16.msra.mxu0 0
  %153 = vmatprep.subr.bf16.mxu0 0
  %154 = vmatpush1.bf16.msra.mxu0 0
  %155 = vmatprep.subr.bf16.mxu0 0
  %156 = vmatpush1.bf16.msra.mxu0 0
  %157 = vmatprep.subr.bf16.mxu0 0
  %158 = vmatpush1.bf16.msra.mxu0 0
  %159 = vmatprep.mubr.bf16.mxu0 0
  %160 = vmatmul.mubr.bf16.gmra.mrb[0].mxu0 %v67
  %v161 = vpop.f32.mrb[0].mxu0
  %v162 = vadd.f32 0.0, %v161
  %v163 = vpop.f32.mrb[0].mxu0
  %v164 = vpop.f32.mrb[0].mxu0
  %v165 = vadd.f32 0.0, %v164
  %v166 = vpop.f32.mrb[0].mxu0
  %167 = vmatprep.mubr.bf16.mxu0 0
  %168 = vmatmul.mubr.bf16.gmra.mrb[0].mxu0 %v68
  %v169 = vpop.f32.mrb[0].mxu0
  %v170 = vadd.f32 0.0, %v169
  %v171 = vpop.f32.mrb[0].mxu0
  %v172 = vpop.f32.mrb[0].mxu0
  %v173 = vadd.f32 0.0, %v172
  %v174 = vpop.f32.mrb[0].mxu0
  %175 = vmatprep.mubr.bf16.mxu0 0
  %176 = vmatmul.mubr.bf16.gmra.mrb[0].mxu0 %v69
  %v177 = vpop.f32.mrb[0].mxu0
  %v178 = vadd.f32 0.0, %v177
  %v179 = vpop.f32.mrb[0].mxu0
  %v180 = vpop.f32.mrb[0].mxu0
  %v181 = vadd.f32 0.0, %v180
  %v182 = vpop.f32.mrb[0].mxu0
  %183 = vmatprep.mubr.bf16.mxu0 0
  %184 = vmatmul.mubr.bf16.gmra.mrb[0].mxu0 %v70
  %v185 = vpop.f32.mrb[0].mxu0
  %v186 = vadd.f32 0.0, %v185
  %v187 = vpop.f32.mrb[0].mxu0
  %v188 = vpop.f32.mrb[0].mxu0
  %v189 = vadd.f32 0.0, %v188
  %v190 = vpop.f32.mrb[0].mxu0
  %191 = vmatprep.mubr.bf16.mxu0 0
  %192 = vmatmul.mubr.bf16.gmra.mrb[0].mxu0 %v71
  %v193 = vpop.f32.mrb[0].mxu0
  %v194 = vadd.f32 0.0, %v193
  %v195 = vpop.f32.mrb[0].mxu0
  %v196 = vpop.f32.mrb[0].mxu0
  %v197 = vadd.f32 0.0, %v196
  %v198 = vpop.f32.mrb[0].mxu0
  %199 = vmatprep.mubr.bf16.mxu0 0
  %200 = vmatmul.mubr.bf16.gmra.mrb[0].mxu0 %v72
  %v201 = vpop.f32.mrb[0].mxu0
  %v202 = vadd.f32 0.0, %v201
  %v203 = vpop.f32.mrb[0].mxu0
  %v204 = vpop.f32.mrb[0].mxu0
  %v205 = vadd.f32 0.0, %v204
  %v206 = vpop.f32.mrb[0].mxu0
  %207 = vdwg.mxu0
  %v208 = vld [vmem:[%s1] sm:$0xff]
  %v209 = vld [vmem:[%s1 + $0x8] sm:$0xff]
  %v210 = vld [vmem:[%s1 + $0x10] sm:$0xff]
  %v211 = vld [vmem:[%s1 + $0x18] sm:$0xff]
  %v212 = vld [vmem:[%s1 + $0x20] sm:$0xff]
  %v213 = vld [vmem:[%s1 + $0x28] sm:$0xff]
  %v214 = vld [vmem:[%s1 + $0x30] sm:$0xff]
  %v215 = vld [vmem:[%s1 + $0x38] sm:$0xff]
  %v216 = vld [vmem:[%s1 + $0x40] sm:$0xff]
  %v217 = vld [vmem:[%s1 + $0x48] sm:$0xff]
  %v218 = vld [vmem:[%s1 + $0x50] sm:$0xff]
  %v219 = vld [vmem:[%s1 + $0x58] sm:$0xff]
  %v220 = vmul.f32 %v208, %v162
  %v221 = vmul.f32 %v209, %v165
  %v222 = vmul.f32 %v210, %v170
  %v223 = vmul.f32 %v211, %v173
  %v224 = vmul.f32 %v212, %v178
  %v225 = vmul.f32 %v213, %v181
  %v226 = vmul.f32 %v214, %v186
  %v227 = vmul.f32 %v215, %v189
  %v228 = vmul.f32 %v216, %v194
  %v229 = vmul.f32 %v217, %v197
  %v230 = vmul.f32 %v218, %v202
  %v231 = vmul.f32 %v219, %v205
  %232 = vadd.xlane.f32.xlu0 %v220
  %v233 = vpop.xlane.xlu0 %232
  %v234 = vrot.slane %v233, 4
  %v235 = vadd.f32 %v233, %v234
  %v236 = vrot.slane %v235, 2
  %v237 = vadd.f32 %v235, %v236
  %v238 = vrot.slane %v237, 1
  %v239 = vadd.f32 %v237, %v238
  %s240 = vtos %v239
  %s241 = smul.f32 %s240, 0.0009765625
  %v242 = vadd.f32 %v221, %v222
  %v243 = vadd.f32 %v242, %v223
  %v244 = vadd.f32 %v243, %v224
  %v245 = vadd.f32 %v244, %v225
  %v246 = vadd.f32 %v245, %v226
  %v247 = vadd.f32 %v246, %v227
  %v248 = vadd.f32 %v247, %v228
  %v249 = vadd.f32 %v248, %v229
  %v250 = vadd.f32 %v249, %v230
  %v251 = vadd.f32 %v250, %v231
  %252 = vadd.xlane.f32.xlu0 %v251
  %v253 = vpop.xlane.xlu0 %252
  %v254 = vrot.slane %v253, 4
  %v255 = vadd.f32 %v253, %v254
  %v256 = vrot.slane %v255, 2
  %v257 = vadd.f32 %v255, %v256
  %v258 = vrot.slane %v257, 1
  %v259 = vadd.f32 %v257, %v258
  %s260 = vtos %v259
  %s261 = smul.f32 %s260, -4.8828126e-05
  %s262 = sadd.f32 %s241, %s261
  %v263 = vstv %s262
  %264 = vst [vmem:[%s3] sm:$0xff] %v263
  // Predicated region
  $region14: #{contrastive_spatial_loss.1} parent=0 // pred_check
    _
  $region15: #{contrastive_spatial_loss.1} parent=0 // pred_check_branch
    %266 = sbr.rel (0) target = $region17
  $region16: #{contrastive_spatial_loss.1} parent=0 // pred_region
    _
  $region17: #{contrastive_spatial_loss.1} parent=0 // pred_fallthru
    _
  // Predicated region
  $region18: #{contrastive_spatial_loss.1} parent=0 // pred_check
    _
  $region19: #{contrastive_spatial_loss.1} parent=0 // pred_check_branch
    %268 = sbr.rel (0) target = $region21
  $region20: #{contrastive_spatial_loss.1} parent=0 // pred_region
    _
  $region21: #{contrastive_spatial_loss.1} parent=0 // pred_fallthru
    _

</llo_original>
